<compile_context>
chip_gen: v7x
topology: tpu7x:2x2x1
jax: 0.10.0
libtpu: 0.0.40
codegen_flags: <defaults>
</compile_context>

<pallas_src>
import math
from functools import partial

import jax
import jax.numpy as jnp
from jax.experimental import pallas as pl
from jax.experimental.pallas import tpu as pltpu

LANE = 128      # TPU lane width (last-dim alignment target)
SUBLANE = 8     # TPU sublane width (second-to-last-dim alignment target)


def _round_up(x, m):
    return ((x + m - 1) // m) * m


# ---------------------------------------------------------------------------
# Kernel: two MXU matmuls + VPU bias/ReLU per (TB, *) batch tile.
# ---------------------------------------------------------------------------
def _decoder_kernel(z_ref, w1_ref, b1_ref, w2_ref, b2_ref, o_ref):
    z = z_ref[...]
    h = jnp.dot(z, w1_ref[...], preferred_element_type=jnp.float32) + b1_ref[...]
    h = jnp.maximum(h, 0.0)                                        # ReLU
    out = jnp.dot(h, w2_ref[...], preferred_element_type=jnp.float32) + b2_ref[...]
    o_ref[...] = out.astype(o_ref.dtype)


# ---------------------------------------------------------------------------
# Parameter prep: zero-pad ONLY the hidden dim (100 -> 128) so the intermediate
# and the weight tiles are lane-dense. Zero padding is bit-identical:
#   ReLU(z @ 0 + 0) = 0 and zero rows of w2 contribute nothing.
# The output dim is left unpadded (see perf notes above).
# ---------------------------------------------------------------------------
def prepare_decoder_params(w1, b1, w2, b2):
    """w1: (Z,H) b1: (1,H) w2: (H,O) b2: (1,O)  ->  hidden-padded params."""
    z_dim, hidden = w1.shape
    _, out_dim = w2.shape
    hp = _round_up(hidden, LANE)
    w1p = jnp.zeros((z_dim, hp), w1.dtype).at[:, :hidden].set(w1)
    b1p = jnp.zeros((1, hp), b1.dtype).at[:, :hidden].set(b1.reshape(1, hidden))
    w2p = jnp.zeros((hp, out_dim), w2.dtype).at[:hidden, :].set(w2)
    b2p = b2.reshape(1, out_dim)
    return w1p, b1p, w2p, b2p, out_dim


def _choose_batch_tile(B, block_b):
    """Pick the batch tile TB (multiple of 8).

    - Never larger than block_b (VMEM / pipelining budget).
    - Never larger than round_up(B, 8) (no point over-allocating for tiny B).
    - Capped at round_up(cdiv(B, 2), 8) so any batch with >= 2 sublane-groups
      yields >= 2 grid steps -> "parallel" semantics can use both v7x TCs.
    """
    tb = min(block_b,
             _round_up(pl.cdiv(B, 2), SUBLANE),
             _round_up(B, SUBLANE))
    return max(tb, SUBLANE)


# ---------------------------------------------------------------------------
# Wrapper: batch-tiled grid (ragged last block handled by Pallas), resident
# weights via constant index maps, unpadded (B, out_dim) output.
# ---------------------------------------------------------------------------
@partial(jax.jit, static_argnames=("block_b",))
def decoder_forward(z, w1p, b1p, w2p, b2p, *, block_b=2048):
    B, Z = z.shape
    Hp = w1p.shape[1]
    Od = w2p.shape[1]

    TB = _choose_batch_tile(B, block_b)
    grid = (pl.cdiv(B, TB),)

    flops = 2 * B * (Z * Hp + Hp * Od)
    bytes_accessed = 4 * (B * Z + Z * Hp + Hp + Hp * Od + Od + B * Od)

    out = pl.pallas_call(
        _decoder_kernel,
        out_shape=jax.ShapeDtypeStruct((B, Od), z.dtype),
        grid=grid,
        in_specs=[
            pl.BlockSpec((TB, Z), lambda i: (i, 0)),     # batch-tiled activations
            pl.BlockSpec((Z, Hp), lambda i: (0, 0)),     # weights: VMEM-resident
            pl.BlockSpec((1, Hp), lambda i: (0, 0)),
            pl.BlockSpec((Hp, Od), lambda i: (0, 0)),
            pl.BlockSpec((1, Od), lambda i: (0, 0)),
        ],
        # Last dim == full array dim, so no 128-padding needed; no wrapper slice.
        out_specs=pl.BlockSpec((TB, Od), lambda i: (i, 0)),
        compiler_params=pltpu.CompilerParams(
            dimension_semantics=("parallel",),           # shard batch across TCs (v7x)
            vmem_limit_bytes=32 * 1024 * 1024,           # safe on v5e/v6e/v7x
        ),
        cost_estimate=pl.CostEstimate(
            flops=flops, transcendentals=0, bytes_accessed=bytes_accessed),
    )(z, w1p, b1p, w2p, b2p)

    return out


# ---------------------------------------------------------------------------
# Init mimicking PyTorch nn.Linear defaults; weights stored transposed (in,out).
# ---------------------------------------------------------------------------
def init_decoder_params(key, z_dim, hidden, out_dim, dtype=jnp.float32):
    k1, k2, k3, k4 = jax.random.split(key, 4)

    bound1 = 1.0 / math.sqrt(z_dim)
    w1 = jax.random.uniform(k1, (z_dim, hidden), dtype, -bound1, bound1)
    b1 = jax.random.uniform(k2, (1, hidden), dtype, -bound1, bound1)

    bound2 = 1.0 / math.sqrt(hidden)
    w2 = jax.random.uniform(k3, (hidden, out_dim), dtype, -bound2, bound2)
    b2 = jax.random.uniform(k4, (1, out_dim), dtype, -bound2, bound2)
    return w1, b1, w2, b2


def reference_forward(z, w1, b1, w2, b2):
    h = jnp.maximum(z @ w1 + b1, 0.0)
    return h @ w2 + b2


if __name__ == "__main__":
    # Module hyperparameters: inp_size=(16,), z=32 -> Linear(32,100), ReLU, Linear(100,16)
    z_dim = 32
    hidden = 100
    out_dim = 16

    key = jax.random.PRNGKey(0)
    kz, kz2, kp = jax.random.split(key, 3)
    w1, b1, w2, b2 = init_decoder_params(kp, z_dim, hidden, out_dim)
    # Pad params once (weights are static; in a real model do this at load time).
    w1p, b1p, w2p, b2p, odim = prepare_decoder_params(w1, b1, w2, b2)

    # Small primary test (single grid step).
    batch = 8
    z = jax.random.normal(kz, (batch, z_dim), jnp.float32)
    out = decoder_forward(z, w1p, b1p, w2p, b2p)
    out = jax.block_until_ready(out)
    ref = reference_forward(z, w1, b1, w2, b2)
    assert out.shape == (batch, out_dim), out.shape
    assert jnp.allclose(out, ref, atol=1e-5, rtol=1e-5)

    # Secondary test exercising a multi-step grid with a ragged final block.
    batch2 = 50
    z2 = jax.random.normal(kz2, (batch2, z_dim), jnp.float32)
    out2 = jax.block_until_ready(decoder_forward(z2, w1p, b1p, w2p, b2p))
    ref2 = reference_forward(z2, w1, b1, w2, b2)
    assert out2.shape == (batch2, out_dim), out2.shape
    assert jnp.allclose(out2, ref2, atol=1e-5, rtol=1e-5)

    print("KERNEL_OK")
</pallas_src>

<mosaic_0001>
module attributes {stable_mosaic.version = 11 : i64} {
  func.func @_decoder_kernel(%arg0: i32, %arg1: memref<8x32xf32, #tpu.memory_space<vmem>>, %arg2: memref<32x128xf32, #tpu.memory_space<vmem>>, %arg3: memref<1x128xf32, #tpu.memory_space<vmem>>, %arg4: memref<128x16xf32, #tpu.memory_space<vmem>>, %arg5: memref<1x16xf32, #tpu.memory_space<vmem>>, %arg6: memref<8x16xf32, #tpu.memory_space<vmem>>) attributes {dimension_semantics = [#tpu.dimension_semantics<parallel>], iteration_bounds = array<i64: 1>, scalar_prefetch = 0 : i64, scratch_operands = 0 : i64, tpu.core_type = #tpu.core_type<tc>, window_params = [{transform_indices = @transform_0, window_bounds = array<i64: 8, 32>}, {pipeline_mode = #tpu.pipeline_mode<synchronous>, transform_indices = @transform_1, window_bounds = array<i64: 32, 128>}, {pipeline_mode = #tpu.pipeline_mode<synchronous>, transform_indices = @transform_2, window_bounds = array<i64: 1, 128>}, {pipeline_mode = #tpu.pipeline_mode<synchronous>, transform_indices = @transform_3, window_bounds = array<i64: 128, 16>}, {pipeline_mode = #tpu.pipeline_mode<synchronous>, transform_indices = @transform_4, window_bounds = array<i64: 1, 16>}, {transform_indices = @transform_5, window_bounds = array<i64: 8, 16>}]} {
    %c0 = arith.constant 0 : index
    %c0_0 = arith.constant 0 : index
    %0 = vector.load %arg1[%c0, %c0_0] : memref<8x32xf32, #tpu.memory_space<vmem>>, vector<8x32xf32>
    %c0_1 = arith.constant 0 : index
    %c0_2 = arith.constant 0 : index
    %1 = vector.load %arg2[%c0_1, %c0_2] : memref<32x128xf32, #tpu.memory_space<vmem>>, vector<32x128xf32>
    %cst = arith.constant dense<0.000000e+00> : vector<8x128xf32>
    %2 = tpu.matmul %0, %1, %cst {dimension_numbers = #tpu.dot_dimension_numbers<[1], [0], [0], [1], [0, 0, 1, 1], [], []>} : vector<8x32xf32>, vector<32x128xf32>, vector<8x128xf32> -> vector<8x128xf32>
    %c0_3 = arith.constant 0 : index
    %c0_4 = arith.constant 0 : index
    %3 = vector.load %arg3[%c0_3, %c0_4] : memref<1x128xf32, #tpu.memory_space<vmem>>, vector<1x128xf32>
    %4 = vector.broadcast %3 : vector<1x128xf32> to vector<8x128xf32>
    %5 = arith.addf %2, %4 : vector<8x128xf32>
    %cst_5 = arith.constant 0.000000e+00 : f32
    %6 = vector.broadcast %cst_5 : f32 to vector<8x128xf32>
    %7 = arith.maximumf %5, %6 : vector<8x128xf32>
    %c0_6 = arith.constant 0 : index
    %c0_7 = arith.constant 0 : index
    %8 = vector.load %arg4[%c0_6, %c0_7] : memref<128x16xf32, #tpu.memory_space<vmem>>, vector<128x16xf32>
    %cst_8 = arith.constant dense<0.000000e+00> : vector<8x16xf32>
    %9 = tpu.matmul %7, %8, %cst_8 {dimension_numbers = #tpu.dot_dimension_numbers<[1], [0], [0], [1], [0, 0, 1, 1], [], []>} : vector<8x128xf32>, vector<128x16xf32>, vector<8x16xf32> -> vector<8x16xf32>
    %c0_9 = arith.constant 0 : index
    %c0_10 = arith.constant 0 : index
    %10 = vector.load %arg5[%c0_9, %c0_10] : memref<1x16xf32, #tpu.memory_space<vmem>>, vector<1x16xf32>
    %11 = vector.broadcast %10 : vector<1x16xf32> to vector<8x16xf32>
    %12 = arith.addf %9, %11 : vector<8x16xf32>
    %c0_11 = arith.constant 0 : index
    %c0_12 = arith.constant 0 : index
    %13 = vector.load %arg6[%c0_11, %c0_12] : memref<8x16xf32, #tpu.memory_space<vmem>>, vector<8x16xf32>
    tpu.vector_store %arg6[%c0_11, %c0_12], %12 {strides = array<i32>} : memref<8x16xf32, #tpu.memory_space<vmem>>, vector<8x16xf32>,
    return
  }
  func.func @transform_0(%arg0: i32) -> (i32, i32) {
    %c0_i32 = arith.constant 0 : i32
    %c0_i32_0 = arith.constant 0 : i32
    return %arg0, %c0_i32 : i32, i32
  }
  func.func @transform_1(%arg0: i32) -> (i32, i32) {
    %c0_i32 = arith.constant 0 : i32
    %c0_i32_0 = arith.constant 0 : i32
    %c0_i32_1 = arith.constant 0 : i32
    return %c0_i32, %c0_i32_0 : i32, i32
  }
  func.func @transform_2(%arg0: i32) -> (i32, i32) {
    %c0_i32 = arith.constant 0 : i32
    %c0_i32_0 = arith.constant 0 : i32
    %c0_i32_1 = arith.constant 0 : i32
    return %c0_i32, %c0_i32_0 : i32, i32
  }
  func.func @transform_3(%arg0: i32) -> (i32, i32) {
    %c0_i32 = arith.constant 0 : i32
    %c0_i32_0 = arith.constant 0 : i32
    %c0_i32_1 = arith.constant 0 : i32
    return %c0_i32, %c0_i32_0 : i32, i32
  }
  func.func @transform_4(%arg0: i32) -> (i32, i32) {
    %c0_i32 = arith.constant 0 : i32
    %c0_i32_0 = arith.constant 0 : i32
    %c0_i32_1 = arith.constant 0 : i32
    return %c0_i32, %c0_i32_0 : i32, i32
  }
  func.func @transform_5(%arg0: i32) -> (i32, i32) {
    %c0_i32 = arith.constant 0 : i32
    %c0_i32_0 = arith.constant 0 : i32
    return %arg0, %c0_i32 : i32, i32
  }
}

</mosaic_0001>

<llo_original>
// kernel: decoder_forward.1
$region0: #{decoder_forward.1}
  #allocation0 [shape = 'u32[]', space=smem, size = 0x4, offset = 0x4, fixed_abs, tag = 'smem constant byte address 0x4 - core index']
  #allocation1 [shape = 'u32[144,128]{1,0:T(1,128)}', space=vmem, size = 0x12000, scoped, tag = 'internal scratch']
  %s0 = inlined_call_operand.vmem [shape: f32[8,32], index: 0, kind: input, shape index: {}]
  %s1 = inlined_call_operand.vmem [shape: f32[32,128], index: 1, kind: input, shape index: {}]
  %s2 = inlined_call_operand.vmem [shape: f32[1,128], index: 2, kind: input, shape index: {}]
  %s3 = inlined_call_operand.vmem [shape: f32[128,16], index: 3, kind: input, shape index: {}]
  %s4 = inlined_call_operand.vmem [shape: f32[1,16], index: 4, kind: input, shape index: {}]
  %s5 = inlined_call_operand.hbm [shape: f32[8,16], index: 5, kind: output, shape index: {}]
  %s6 = sld [smem:[#allocation0]]
  $region30: #{decoder_forward.1} parent=0
    _
  %s8 = ssub.s32 1, %s6
  %s9 = scalar_select 0, %s8, %s6
  $region1: #{decoder_forward.1} parent=0
    #allocation2 [shape = 'u8[4096]{0}', space=vmem, size = 0x1000, scoped, tag = 'output window, operand 0, single buffered']
    #allocation3 [shape = 's32[1]{0}', space=sflag, size = 0x4, scoped, tag = 'scoped memory for decoder_forward.1']
    %10 = vsyncpa [#allocation3], 0
    // Predicated region
    $region2: #{decoder_forward.1} parent=1 // pred_check
      _
    $region3: #{decoder_forward.1} parent=1 // pred_check_branch
      %12 = sbr.rel (0) target = $region5
    $region4: #{decoder_forward.1} parent=1 // pred_region
      _
    $region5: #{decoder_forward.1} parent=1 // pred_fallthru
      _
    // Predicated region
    $region6: #{decoder_forward.1} parent=1 // pred_check
      _
    $region7: #{decoder_forward.1} parent=1 // pred_check_branch
      %14 = sbr.rel (0) target = $region9
    $region8: #{decoder_forward.1} parent=1 // pred_region
      _
    $region9: #{decoder_forward.1} parent=1 // pred_fallthru
      _
    // Predicated region
    $region10: #{decoder_forward.1} parent=1 // pred_check
      _
    $region11: #{decoder_forward.1} parent=1 // pred_check_branch
      %16 = sbr.rel (0) target = $region13
    $region12: #{decoder_forward.1} parent=1 // pred_region
      _
    $region13: #{decoder_forward.1} parent=1 // pred_fallthru
      _
    // Predicated region
    $region14: #{decoder_forward.1} parent=1 // pred_check
      _
    $region15: #{decoder_forward.1} parent=1 // pred_check_branch
      %18 = sbr.rel (0) target = $region17
    $region16: #{decoder_forward.1} parent=1 // pred_region
      _
    $region17: #{decoder_forward.1} parent=1 // pred_fallthru
      _
    // Predicated region
    $region18: #{decoder_forward.1} parent=1 // pred_check
      _
    $region19: #{decoder_forward.1} parent=1 // pred_check_branch
      %20 = sbr.rel (0) target = $region21
    $region20: #{decoder_forward.1} parent=1 // pred_region
      _
    $region21: #{decoder_forward.1} parent=1 // pred_fallthru
      _
    %v21 = vld [vmem:[%s0] sm:$0xff]
    %v22 = vld [vmem:[%s1] sm:$0xff]
    %v23 = vld [vmem:[%s1 + $0x8] sm:$0xff]
    %v24 = vld [vmem:[%s1 + $0x10] sm:$0xff]
    %v25 = vld [vmem:[%s1 + $0x18] sm:$0xff]
    %v26 = vld [vmem:[%s2] sm:$0x1]
    %v28 = vlaneseq
    %v29 = vshrl.u32 %v28, 7
    %v30 = vsub.s32 0, %v29
    %v31 = vrot.slane %v26, %v30
    %vm33 = vcmask 261120
    %v35 = vsel %vm33, %v21, 0
    %37 = vmatprep.subr.mxu0 0.0
    %38 = vmatpush1.msra.mxu0 %v22
    %39 = vmatprep.subr.mxu0 0.0
    %40 = vmatpush1.msra.mxu0 %v23
    %41 = vmatprep.subr.mxu0 0.0
    %42 = vmatpush1.msra.mxu0 %v24
    %43 = vmatprep.subr.mxu0 0.0
    %44 = vmatpush1.msra.mxu0 %v25
    %45 = vmatprep.subr.mxu0 0.0
    %46 = vmatpush1.msra.mxu0 0.0
    %47 = vmatprep.subr.mxu0 0.0
    %48 = vmatpush1.msra.mxu0 0.0
    %49 = vmatprep.subr.mxu0 0.0
    %50 = vmatpush1.msra.mxu0 0.0
    %51 = vmatprep.subr.mxu0 0.0
    %52 = vmatpush1.msra.mxu0 0.0
    %53 = vmatprep.subr.mxu0 0.0
    %54 = vmatpush1.msra.mxu0 0.0
    %55 = vmatprep.subr.mxu0 0.0
    %56 = vmatpush1.msra.mxu0 0.0
    %57 = vmatprep.subr.mxu0 0.0
    %58 = vmatpush1.msra.mxu0 0.0
    %59 = vmatprep.subr.mxu0 0.0
    %60 = vmatpush1.msra.mxu0 0.0
    %61 = vmatprep.subr.mxu0 0.0
    %62 = vmatpush1.msra.mxu0 0.0
    %63 = vmatprep.subr.mxu0 0.0
    %64 = vmatpush1.msra.mxu0 0.0
    %65 = vmatprep.subr.mxu0 0.0
    %66 = vmatpush1.msra.mxu0 0.0
    %67 = vmatprep.subr.mxu0 0.0
    %68 = vmatpush1.msra.mxu0 0.0
    %69 = vmatprep.subr.mxu0 0.0
    %70 = vmatpush1.msra.mxu0 0.0
    %71 = vmatprep.subr.mxu0 0.0
    %72 = vmatpush1.msra.mxu0 0.0
    %73 = vmatprep.subr.mxu0 0.0
    %74 = vmatpush1.msra.mxu0 0.0
    %75 = vmatprep.subr.mxu0 0.0
    %76 = vmatpush1.msra.mxu0 0.0
    %77 = vmatprep.subr.mxu0 0.0
    %78 = vmatpush1.msra.mxu0 0.0
    %79 = vmatprep.subr.mxu0 0.0
    %80 = vmatpush1.msra.mxu0 0.0
    %81 = vmatprep.subr.mxu0 0.0
    %82 = vmatpush1.msra.mxu0 0.0
    %83 = vmatprep.subr.mxu0 0.0
    %84 = vmatpush1.msra.mxu0 0.0
    %85 = vmatprep.subr.mxu0 0.0
    %86 = vmatpush1.msra.mxu0 0.0
    %87 = vmatprep.subr.mxu0 0.0
    %88 = vmatpush1.msra.mxu0 0.0
    %89 = vmatprep.subr.mxu0 0.0
    %90 = vmatpush1.msra.mxu0 0.0
    %91 = vmatprep.subr.mxu0 0.0
    %92 = vmatpush1.msra.mxu0 0.0
    %93 = vmatprep.subr.mxu0 0.0
    %94 = vmatpush1.msra.mxu0 0.0
    %95 = vmatprep.subr.mxu0 0.0
    %96 = vmatpush1.msra.mxu0 0.0
    %97 = vmatprep.subr.mxu0 0.0
    %98 = vmatpush1.msra.mxu0 0.0
    %99 = vmatprep.subr.mxu0 0.0
    %100 = vmatpush1.msra.mxu0 0.0
    %101 = vmatprep.mubr.f32.mxu0 0.0
    %102 = vmatmul.mubr.f32.gmra.mrb[0].mxu0 %v35
    %v103 = vpop.f32.mrb[0].mxu0
    %v104 = vadd.f32 %v31, %v103
    %v105 = vpop.f32.mrb[0].mxu0
    %106 = vdwg.mxu0
    %v107 = vmax.f32 %v104, 0.0
    %v108 = vld [vmem:[%s3] sm:$0xff]
    %v109 = vld [vmem:[%s3 + $0x8] sm:$0xff]
    %v110 = vld [vmem:[%s3 + $0x10] sm:$0xff]
    %v111 = vld [vmem:[%s3 + $0x18] sm:$0xff]
    %v112 = vld [vmem:[%s3 + $0x20] sm:$0xff]
    %v113 = vld [vmem:[%s3 + $0x28] sm:$0xff]
    %v114 = vld [vmem:[%s3 + $0x30] sm:$0xff]
    %v115 = vld [vmem:[%s3 + $0x38] sm:$0xff]
    %v116 = vld [vmem:[%s3 + $0x40] sm:$0xff]
    %v117 = vld [vmem:[%s3 + $0x48] sm:$0xff]
    %v118 = vld [vmem:[%s3 + $0x50] sm:$0xff]
    %v119 = vld [vmem:[%s3 + $0x58] sm:$0xff]
    %v120 = vld [vmem:[%s3 + $0x60] sm:$0xff]
    %v121 = vld [vmem:[%s3 + $0x68] sm:$0xff]
    %v122 = vld [vmem:[%s3 + $0x70] sm:$0xff]
    %v123 = vld [vmem:[%s3 + $0x78] sm:$0xff]
    %v124 = vld [vmem:[%s4] sm:$0x1]
    %v126 = vlaneseq
    %v127 = vshrl.u32 %v126, 7
    %v128 = vsub.s32 0, %v127
    %v129 = vrot.slane %v124, %v128
    %131 = vmatprep.subr.mxu0 0.0
    %132 = vmatpush1.msra.mxu0 %v108
    %133 = vmatprep.subr.mxu0 0.0
    %134 = vmatpush1.msra.mxu0 %v109
    %135 = vmatprep.subr.mxu0 0.0
    %136 = vmatpush1.msra.mxu0 %v110
    %137 = vmatprep.subr.mxu0 0.0
    %138 = vmatpush1.msra.mxu0 %v111
    %139 = vmatprep.subr.mxu0 0.0
    %140 = vmatpush1.msra.mxu0 %v112
    %141 = vmatprep.subr.mxu0 0.0
    %142 = vmatpush1.msra.mxu0 %v113
    %143 = vmatprep.subr.mxu0 0.0
    %144 = vmatpush1.msra.mxu0 %v114
    %145 = vmatprep.subr.mxu0 0.0
    %146 = vmatpush1.msra.mxu0 %v115
    %147 = vmatprep.subr.mxu0 0.0
    %148 = vmatpush1.msra.mxu0 %v116
    %149 = vmatprep.subr.mxu0 0.0
    %150 = vmatpush1.msra.mxu0 %v117
    %151 = vmatprep.subr.mxu0 0.0
    %152 = vmatpush1.msra.mxu0 %v118
    %153 = vmatprep.subr.mxu0 0.0
    %154 = vmatpush1.msra.mxu0 %v119
    %155 = vmatprep.subr.mxu0 0.0
    %156 = vmatpush1.msra.mxu0 %v120
    %157 = vmatprep.subr.mxu0 0.0
    %158 = vmatpush1.msra.mxu0 %v121
    %159 = vmatprep.subr.mxu0 0.0
    %160 = vmatpush1.msra.mxu0 %v122
    %161 = vmatprep.subr.mxu0 0.0
    %162 = vmatpush1.msra.mxu0 %v123
    %163 = vmatprep.subr.mxu0 0.0
    %164 = vmatpush1.msra.mxu0 0.0
    %165 = vmatprep.subr.mxu0 0.0
    %166 = vmatpush1.msra.mxu0 0.0
    %167 = vmatprep.subr.mxu0 0.0
    %168 = vmatpush1.msra.mxu0 0.0
    %169 = vmatprep.subr.mxu0 0.0
    %170 = vmatpush1.msra.mxu0 0.0
    %171 = vmatprep.subr.mxu0 0.0
    %172 = vmatpush1.msra.mxu0 0.0
    %173 = vmatprep.subr.mxu0 0.0
    %174 = vmatpush1.msra.mxu0 0.0
    %175 = vmatprep.subr.mxu0 0.0
    %176 = vmatpush1.msra.mxu0 0.0
    %177 = vmatprep.subr.mxu0 0.0
    %178 = vmatpush1.msra.mxu0 0.0
    %179 = vmatprep.subr.mxu0 0.0
    %180 = vmatpush1.msra.mxu0 0.0
    %181 = vmatprep.subr.mxu0 0.0
    %182 = vmatpush1.msra.mxu0 0.0
    %183 = vmatprep.subr.mxu0 0.0
    %184 = vmatpush1.msra.mxu0 0.0
    %185 = vmatprep.subr.mxu0 0.0
    %186 = vmatpush1.msra.mxu0 0.0
    %187 = vmatprep.subr.mxu0 0.0
    %188 = vmatpush1.msra.mxu0 0.0
    %189 = vmatprep.subr.mxu0 0.0
    %190 = vmatpush1.msra.mxu0 0.0
    %191 = vmatprep.subr.mxu0 0.0
    %192 = vmatpush1.msra.mxu0 0.0
    %193 = vmatprep.subr.mxu0 0.0
    %194 = vmatpush1.msra.mxu0 0.0
    %195 = vmatprep.mubr.f32.mxu0 0.0
    %196 = vmatmul.mubr.f32.gmra.mrb[0].mxu0 %v107
    %v197 = vpop.f32.mrb[0].mxu0
    %v198 = vadd.f32 %v129, %v197
    %v199 = vpop.f32.mrb[0].mxu0
    %200 = vdwg.mxu0
    %vm201 = vcmask 130048
    %202 = vst.msk [vmem:[#allocation2] sm:$0xff] %vm201, %v198
    // Predicated region
    $region22: #{decoder_forward.1} parent=1 // pred_check
      _
    $region23: #{decoder_forward.1} parent=1 // pred_check_branch
      %204 = sbr.rel (0) target = $region25
    $region24: #{decoder_forward.1} parent=1 // pred_region
      %s206 = ssub.s32 128, 128
      %207 = vsyncadd [#allocation3], %s206
      %s209 = sshll.u32 [#allocation2], 4
      %s210 = int_to_ptr.vmem [resolvable:$true] %s209
      %212 = dma.vmem_to_hbm [thread:$0]  %s210, 128, %s5, [#allocation3]
    $region25: #{decoder_forward.1} parent=1 // pred_fallthru
      _
    // Predicated region
    $region26: #{decoder_forward.1} parent=1 // pred_check
      _
    $region27: #{decoder_forward.1} parent=1 // pred_check_branch
      %214 = sbr.rel (0) target = $region29
    $region28: #{decoder_forward.1} parent=1 // pred_region
      %215 = dma.done [#allocation3], 128
    $region29: #{decoder_forward.1} parent=1 // pred_fallthru
      _
    %216 = vsyncpa [#allocation3], 1

</llo_original>
